<compile_context>
chip_gen: v7x
topology: tpu7x:2x2x1
jax: 0.10.0
libtpu: 0.0.40
codegen_flags: <defaults>
</compile_context>

<pallas_src>
import functools

import jax
import jax.numpy as jnp
from jax.experimental import pallas as pl
from jax.experimental.pallas import tpu as pltpu


# ---------------------------------------------------------------------------
# helpers
# ---------------------------------------------------------------------------
def _round_up(x, m):
    return (x + m - 1) // m * m


def _vmem_limit_bytes():
    """~75% of physical VMEM: ~96 MiB on v5e/v6e (128 MiB), ~48 MiB on v7x (64 MiB)."""
    try:
        phys = int(pltpu.get_tpu_info().vmem_capacity_bytes)
    except Exception:
        phys = 64 * 1024 * 1024           # conservative (v7x-sized) fallback
    return max(32 * 1024 * 1024, (phys * 3) // 4)


_TS_CANDIDATES = (2048, 1024, 512, 256, 128)


def _pick_conv_tile(S, Kc, Cout, comp_bytes, y_bytes, vmem_limit):
    """Largest lane-dense spatial tile whose double-buffered pass-1 footprint
    fits in ~80% of the per-generation VMEM limit."""
    budget = int(vmem_limit * 0.8)
    s128 = _round_up(S, 128)
    for ts in _TS_CANDIDATES:
        if ts > s128:
            continue
        need = (2 * Kc * ts * comp_bytes        # patches stream (double-buffered)
                + 2 * Cout * ts * y_bytes       # y tile (double-buffered)
                + 2 * Cout * Kc * comp_bytes    # folded weights (double-buffered)
                + 4 * Cout * 4 * 2)             # partial-stat outputs
        if need <= budget:
            return ts
    return 128


def _pick_bn_tile(S_pad, Cout, y_bytes, vmem_limit):
    """Pass 2 is pure mem-bound: take the biggest tile dividing S_pad that fits."""
    budget = int(vmem_limit * 0.8)
    for ts in (4096,) + _TS_CANDIDATES:
        if S_pad % ts != 0:
            continue
        if 4 * Cout * ts * y_bytes + 2 * Cout * 4 * 2 <= budget:
            return ts
    return 128


# ---------------------------------------------------------------------------
# Kernel 1: conv (single folded MXU contraction) + per-tile BN partial stats
# ---------------------------------------------------------------------------
def _conv_stats_kernel(p_ref, w_ref, y_ref, sum_ref, sq_ref):
    # p_ref : (1, Kc, TS)      im2col patches, compute dtype (bf16/f32)
    # w_ref : (Cout, Kc)       folded weights, compute dtype
    # y_ref : (1, Cout, TS)    conv output (bias cancels under batch norm)
    # sum_ref/sq_ref : (1, 1, Cout, 1) per-tile partial BN statistics, f32
    acc = jnp.dot(w_ref[...], p_ref[0],
                  preferred_element_type=jnp.float32)      # (Cout, TS)
    y_ref[0] = acc.astype(y_ref.dtype)
    sum_ref[0, 0] = jnp.sum(acc, axis=1, keepdims=True)        # (Cout, 1)
    sq_ref[0, 0] = jnp.sum(acc * acc, axis=1, keepdims=True)   # (Cout, 1)


# ---------------------------------------------------------------------------
# Kernel 2: BatchNorm (y*inv + shift) + ReLU, tiled, in-place
# ---------------------------------------------------------------------------
def _bn_relu_kernel(y_ref, inv_ref, shift_ref, o_ref):
    # y_ref/o_ref: (1, Cout, TS2) ; inv_ref/shift_ref: (Cout, 1) f32
    yn = y_ref[0].astype(jnp.float32) * inv_ref[...] + shift_ref[...]
    o_ref[0] = jnp.maximum(yn, 0.0).astype(o_ref.dtype)


# ---------------------------------------------------------------------------
# Wrapper: Conv2d_layer.forward (mode='conv', padding='SAME',
#                                norm='batch', activation='relu')
# ---------------------------------------------------------------------------
def conv2d_layer_forward(x_nchw, weight_oihw, bias=None, *, stride=(1, 1),
                         dilation=(1, 1), eps=1e-5,
                         compute_dtype=jnp.bfloat16):
    N, Cin, H, W = x_nchw.shape
    Cout, _, KH, KW = weight_oihw.shape
    if isinstance(stride, int):
        stride = (stride, stride)
    if isinstance(dilation, int):
        dilation = (dilation, dilation)
    sh, sw = stride
    dh, dw = dilation

    # --- 'SAME' reflection padding, identical to the PyTorch module ---------
    f_pad = (KH - 1) * dh                       # height (freq) axis
    t_pad = (KW - 1) * dw                       # width (time) axis
    t_l, t_r = t_pad // 2, t_pad - t_pad // 2
    f_l, f_r = f_pad // 2, f_pad - f_pad // 2
    # Cast to compute dtype BEFORE im2col so the materialized patches move
    # half the HBM bytes on the default bf16 path.
    x_pad = jnp.pad(x_nchw, ((0, 0), (0, 0), (f_l, f_r), (t_l, t_r)),
                    mode='reflect').astype(compute_dtype)
    Hp, Wp = x_pad.shape[2], x_pad.shape[3]
    Hout = (Hp - (KH - 1) * dh - 1) // sh + 1
    Wout = (Wp - (KW - 1) * dw - 1) // sw + 1
    S = Hout * Wout
    Kc = KH * KW * Cin

    # --- MXU-friendly padding of channel / contraction / spatial dims -------
    comp_bytes = jnp.dtype(compute_dtype).itemsize
    y_dtype = compute_dtype                     # bf16 intermediate + output
    y_bytes = jnp.dtype(y_dtype).itemsize
    Cout_p = _round_up(Cout, 16)                # MXU M dim / sublane pack
    Kc_p = _round_up(Kc, 16)                    # contraction dim

    vmem_limit = _vmem_limit_bytes()
    TS = _pick_conv_tile(S, Kc_p, Cout_p, comp_bytes, y_bytes, vmem_limit)
    S_pad = _round_up(S, TS)
    nS = S_pad // TS

    # --- wrapper-side im2col: (N, Kc_p, S_pad), spatial on lanes -------------
    # TODO(synk): for large inputs, replace this materialized im2col with an
    # in-kernel halo-DMA accumulation to remove the ~KH*KW x HBM inflation.
    h_lim = (Hout - 1) * sh + 1
    w_lim = (Wout - 1) * sw + 1
    taps = []
    for kh in range(KH):
        for kw in range(KW):
            taps.append(jax.lax.slice(
                x_pad,
                (0, 0, kh * dh, kw * dw),
                (N, Cin, kh * dh + h_lim, kw * dw + w_lim),
                (1, 1, sh, sw)))                # (N, Cin, Hout, Wout)
    patches = jnp.stack(taps, axis=1).reshape(N, Kc, S)
    patches = jnp.pad(patches, ((0, 0), (0, Kc_p - Kc), (0, S_pad - S)))

    # folded weights (Cout_p, Kc_p) matching the patch K ordering; zero pads inert
    w2 = jnp.transpose(weight_oihw, (0, 2, 3, 1)).reshape(Cout, Kc)
    w2 = jnp.pad(w2, ((0, Cout_p - Cout), (0, Kc_p - Kc))).astype(compute_dtype)
    # Bias is NOT applied: with norm='batch' (gamma=1, beta=0) it cancels
    # exactly, so the add, its DMA stream and its stat contribution are dead work.
    del bias

    grid = (N, nS)
    cparams = pltpu.CompilerParams(
        dimension_semantics=("parallel", "parallel"),
        vmem_limit_bytes=int(vmem_limit))

    # --- pass 1: conv + partial BN stats --------------------------------------
    y, psum, psq = pl.pallas_call(
        _conv_stats_kernel,
        out_shape=(
            jax.ShapeDtypeStruct((N, Cout_p, S_pad), y_dtype),
            jax.ShapeDtypeStruct((N, nS, Cout_p, 1), jnp.float32),
            jax.ShapeDtypeStruct((N, nS, Cout_p, 1), jnp.float32),
        ),
        grid_spec=pltpu.PrefetchScalarGridSpec(
            num_scalar_prefetch=0,
            grid=grid,
            in_specs=[
                pl.BlockSpec((1, Kc_p, TS), lambda n, j: (n, 0, j)),
                pl.BlockSpec((Cout_p, Kc_p), lambda n, j: (0, 0)),
            ],
            out_specs=(
                pl.BlockSpec((1, Cout_p, TS), lambda n, j: (n, 0, j)),
                pl.BlockSpec((1, 1, Cout_p, 1), lambda n, j: (n, j, 0, 0)),
                pl.BlockSpec((1, 1, Cout_p, 1), lambda n, j: (n, j, 0, 0)),
            ),
        ),
        compiler_params=cparams,
    )(patches, w2)

    # --- tiny per-channel stat reduction (padded columns are zero => inert) --
    cnt = jnp.float32(N * S)                    # true element count, not padded
    mean = jnp.sum(psum, axis=(0, 1)) / cnt                   # (Cout_p, 1)
    var = jnp.sum(psq, axis=(0, 1)) / cnt - mean * mean       # biased (train BN)
    var = jnp.maximum(var, 0.0)                 # guard E[y^2]-E[y]^2 cancellation
    inv = jax.lax.rsqrt(var + eps)              # gamma=1, beta=0
    shift = -mean * inv                         # pass-2 is a single fma + max

    # --- pass 2: normalize + ReLU, bigger lane-dense tiles, in place ---------
    TS2 = _pick_bn_tile(S_pad, Cout_p, y_bytes, vmem_limit)
    out = pl.pallas_call(
        _bn_relu_kernel,
        out_shape=jax.ShapeDtypeStruct((N, Cout_p, S_pad), y_dtype),
        grid_spec=pltpu.PrefetchScalarGridSpec(
            num_scalar_prefetch=0,
            grid=(N, S_pad // TS2),
            in_specs=[
                pl.BlockSpec((1, Cout_p, TS2), lambda n, j: (n, 0, j)),
                pl.BlockSpec((Cout_p, 1), lambda n, j: (0, 0)),
                pl.BlockSpec((Cout_p, 1), lambda n, j: (0, 0)),
            ],
            out_specs=pl.BlockSpec((1, Cout_p, TS2), lambda n, j: (n, 0, j)),
        ),
        input_output_aliases={0: 0},            # normalize y in place
        compiler_params=cparams,
    )(y, inv, shift)

    # slice off Cout / spatial padding; NCHW throughout, no transpose needed
    return out[:, :Cout, :S].reshape(N, Cout, Hout, Wout)


# ---------------------------------------------------------------------------
# Pure-JAX reference (for correctness check)
# ---------------------------------------------------------------------------
def _reference(x_nchw, weight_oihw, bias, *, stride=(1, 1), dilation=(1, 1),
               eps=1e-5):
    N, Cin, H, W = x_nchw.shape
    Cout, _, KH, KW = weight_oihw.shape
    dh, dw = dilation
    f_pad = (KH - 1) * dh
    t_pad = (KW - 1) * dw
    t_l, t_r = t_pad // 2, t_pad - t_pad // 2
    f_l, f_r = f_pad // 2, f_pad - f_pad // 2
    x_pad = jnp.pad(x_nchw, ((0, 0), (0, 0), (f_l, f_r), (t_l, t_r)),
                    mode='reflect')
    y = jax.lax.conv_general_dilated(
        x_pad, weight_oihw, window_strides=stride, padding='VALID',
        rhs_dilation=dilation,
        dimension_numbers=('NCHW', 'OIHW', 'NCHW'))
    y = y + bias.reshape(1, Cout, 1, 1)
    mean = jnp.mean(y, axis=(0, 2, 3), keepdims=True)
    var = jnp.mean((y - mean) ** 2, axis=(0, 2, 3), keepdims=True)
    yn = (y - mean) * jax.lax.rsqrt(var + eps)
    return jnp.maximum(yn, 0.0)


if __name__ == "__main__":
    # Small shapes consistent with the module: NCHW input.
    N, Cin, H, W = 2, 4, 16, 16
    Cout, K = 8, 3

    key = jax.random.PRNGKey(0)
    kx, kw, kb = jax.random.split(key, 3)
    x = jax.random.normal(kx, (N, Cin, H, W), dtype=jnp.float32)
    fan_in = Cin * K * K
    bound = 1.0 / (fan_in ** 0.5)
    weight = jax.random.uniform(kw, (Cout, Cin, K, K), jnp.float32,
                                -bound, bound)
    bias = jax.random.uniform(kb, (Cout,), jnp.float32, -bound, bound)

    ref = _reference(x, weight, bias)

    # exact-math path (f32 MXU inputs / f32 intermediate): tight validation
    fwd_f32 = jax.jit(functools.partial(conv2d_layer_forward,
                                        compute_dtype=jnp.float32))
    out_f32 = jax.block_until_ready(fwd_f32(x, weight, bias))
    assert out_f32.shape == (N, Cout, H, W)
    assert jnp.allclose(out_f32, ref, atol=2e-3, rtol=2e-3)

    # default fast path (bf16 MXU inputs + bf16 intermediate, f32 stats)
    fwd = jax.jit(conv2d_layer_forward)
    out = jax.block_until_ready(fwd(x, weight, bias))
    assert out.shape == (N, Cout, H, W)
    assert jnp.allclose(out.astype(jnp.float32), ref, atol=6e-2, rtol=6e-2)

    print("KERNEL_OK")
</pallas_src>

<mosaic_0001>
module attributes {stable_mosaic.version = 11 : i64} {
  func.func @_conv_stats_kernel(%arg0: i32, %arg1: i32, %arg2: memref<1x48x256xf32, #tpu.memory_space<vmem>>, %arg3: memref<16x48xf32, #tpu.memory_space<vmem>>, %arg4: memref<1x16x256xf32, #tpu.memory_space<vmem>>, %arg5: memref<1x1x16x1xf32, #tpu.memory_space<vmem>>, %arg6: memref<1x1x16x1xf32, #tpu.memory_space<vmem>>) attributes {dimension_semantics = [#tpu.dimension_semantics<parallel>, #tpu.dimension_semantics<parallel>], iteration_bounds = array<i64: 2, 1>, scalar_prefetch = 0 : i64, scratch_operands = 0 : i64, tpu.core_type = #tpu.core_type<tc>, window_params = [{transform_indices = @transform_0, window_bounds = array<i64: 1, 48, 256>}, {pipeline_mode = #tpu.pipeline_mode<synchronous>, transform_indices = @transform_1, window_bounds = array<i64: 16, 48>}, {transform_indices = @transform_2, window_bounds = array<i64: 1, 16, 256>}, {transform_indices = @transform_3, window_bounds = array<i64: 1, 1, 16, 1>}, {transform_indices = @transform_4, window_bounds = array<i64: 1, 1, 16, 1>}]} {
    %c0 = arith.constant 0 : index
    %c0_0 = arith.constant 0 : index
    %0 = vector.load %arg3[%c0, %c0_0] : memref<16x48xf32, #tpu.memory_space<vmem>>, vector<16x48xf32>
    %c0_1 = arith.constant 0 : index
    %c0_2 = arith.constant 0 : index
    %c0_3 = arith.constant 0 : index
    %1 = vector.load %arg2[%c0_1, %c0_2, %c0_3] : memref<1x48x256xf32, #tpu.memory_space<vmem>>, vector<1x48x256xf32>
    %2 = vector.shape_cast %1 : vector<1x48x256xf32> to vector<48x256xf32>
    %cst = arith.constant dense<0.000000e+00> : vector<16x256xf32>
    %3 = tpu.matmul %0, %2, %cst {dimension_numbers = #tpu.dot_dimension_numbers<[1], [0], [0], [1], [0, 0, 1, 1], [], []>} : vector<16x48xf32>, vector<48x256xf32>, vector<16x256xf32> -> vector<16x256xf32>
    %c0_4 = arith.constant 0 : index
    %c0_5 = arith.constant 0 : index
    %c0_6 = arith.constant 0 : index
    %4 = vector.load %arg4[%c0_4, %c0_5, %c0_6] : memref<1x16x256xf32, #tpu.memory_space<vmem>>, vector<1x16x256xf32>
    %5 = vector.shape_cast %4 : vector<1x16x256xf32> to vector<16x256xf32>
    %6 = vector.shape_cast %3 : vector<16x256xf32> to vector<1x16x256xf32>
    tpu.vector_store %arg4[%c0_4, %c0_5, %c0_6], %6 {strides = array<i32>} : memref<1x16x256xf32, #tpu.memory_space<vmem>>, vector<1x16x256xf32>,
    %cst_7 = arith.constant dense<0.000000e+00> : vector<16xf32>
    %7 = vector.multi_reduction <add>, %3, %cst_7 [1] : vector<16x256xf32> to vector<16xf32>
    %8 = vector.shape_cast %7 : vector<16xf32> to vector<16x1xf32>
    %c0_8 = arith.constant 0 : index
    %c0_9 = arith.constant 0 : index
    %c0_10 = arith.constant 0 : index
    %c0_11 = arith.constant 0 : index
    %9 = vector.load %arg5[%c0_8, %c0_9, %c0_10, %c0_11] : memref<1x1x16x1xf32, #tpu.memory_space<vmem>>, vector<1x1x16x1xf32>
    %10 = vector.shape_cast %9 : vector<1x1x16x1xf32> to vector<16x1xf32>
    %11 = vector.shape_cast %8 : vector<16x1xf32> to vector<1x1x16x1xf32>
    tpu.vector_store %arg5[%c0_8, %c0_9, %c0_10, %c0_11], %11 {strides = array<i32>} : memref<1x1x16x1xf32, #tpu.memory_space<vmem>>, vector<1x1x16x1xf32>,
    %12 = arith.mulf %3, %3 : vector<16x256xf32>
    %cst_12 = arith.constant dense<0.000000e+00> : vector<16xf32>
    %13 = vector.multi_reduction <add>, %12, %cst_12 [1] : vector<16x256xf32> to vector<16xf32>
    %14 = vector.shape_cast %13 : vector<16xf32> to vector<16x1xf32>
    %c0_13 = arith.constant 0 : index
    %c0_14 = arith.constant 0 : index
    %c0_15 = arith.constant 0 : index
    %c0_16 = arith.constant 0 : index
    %15 = vector.load %arg6[%c0_13, %c0_14, %c0_15, %c0_16] : memref<1x1x16x1xf32, #tpu.memory_space<vmem>>, vector<1x1x16x1xf32>
    %16 = vector.shape_cast %15 : vector<1x1x16x1xf32> to vector<16x1xf32>
    %17 = vector.shape_cast %14 : vector<16x1xf32> to vector<1x1x16x1xf32>
    tpu.vector_store %arg6[%c0_13, %c0_14, %c0_15, %c0_16], %17 {strides = array<i32>} : memref<1x1x16x1xf32, #tpu.memory_space<vmem>>, vector<1x1x16x1xf32>,
    return
  }
  func.func @transform_0(%arg0: i32, %arg1: i32) -> (i32, i32, i32) {
    %c0_i32 = arith.constant 0 : i32
    %c0_i32_0 = arith.constant 0 : i32
    return %arg0, %c0_i32, %arg1 : i32, i32, i32
  }
  func.func @transform_1(%arg0: i32, %arg1: i32) -> (i32, i32) {
    %c0_i32 = arith.constant 0 : i32
    %c0_i32_0 = arith.constant 0 : i32
    %c0_i32_1 = arith.constant 0 : i32
    return %c0_i32, %c0_i32_0 : i32, i32
  }
  func.func @transform_2(%arg0: i32, %arg1: i32) -> (i32, i32, i32) {
    %c0_i32 = arith.constant 0 : i32
    %c0_i32_0 = arith.constant 0 : i32
    return %arg0, %c0_i32, %arg1 : i32, i32, i32
  }
  func.func @transform_3(%arg0: i32, %arg1: i32) -> (i32, i32, i32, i32) {
    %c0_i32 = arith.constant 0 : i32
    %c0_i32_0 = arith.constant 0 : i32
    %c0_i32_1 = arith.constant 0 : i32
    return %arg0, %arg1, %c0_i32, %c0_i32_0 : i32, i32, i32, i32
  }
  func.func @transform_4(%arg0: i32, %arg1: i32) -> (i32, i32, i32, i32) {
    %c0_i32 = arith.constant 0 : i32
    %c0_i32_0 = arith.constant 0 : i32
    %c0_i32_1 = arith.constant 0 : i32
    return %arg0, %arg1, %c0_i32, %c0_i32_0 : i32, i32, i32, i32
  }
}

module attributes {stable_mosaic.version = 11 : i64} {
  func.func @_bn_relu_kernel(%arg0: i32, %arg1: i32, %arg2: memref<1x16x256xf32, #tpu.memory_space<vmem>>, %arg3: memref<16x1xf32, #tpu.memory_space<vmem>>, %arg4: memref<16x1xf32, #tpu.memory_space<vmem>>, %arg5: memref<1x16x256xf32, #tpu.memory_space<vmem>>) attributes {dimension_semantics = [#tpu.dimension_semantics<parallel>, #tpu.dimension_semantics<parallel>], iteration_bounds = array<i64: 2, 1>, scalar_prefetch = 0 : i64, scratch_operands = 0 : i64, tpu.core_type = #tpu.core_type<tc>, window_params = [{transform_indices = @transform_0, window_bounds = array<i64: 1, 16, 256>}, {pipeline_mode = #tpu.pipeline_mode<synchronous>, transform_indices = @transform_1, window_bounds = array<i64: 16, 1>}, {pipeline_mode = #tpu.pipeline_mode<synchronous>, transform_indices = @transform_2, window_bounds = array<i64: 16, 1>}, {transform_indices = @transform_3, window_bounds = array<i64: 1, 16, 256>}]} {
    %c0 = arith.constant 0 : index
    %c0_0 = arith.constant 0 : index
    %c0_1 = arith.constant 0 : index
    %0 = vector.load %arg2[%c0, %c0_0, %c0_1] : memref<1x16x256xf32, #tpu.memory_space<vmem>>, vector<1x16x256xf32>
    %1 = vector.shape_cast %0 : vector<1x16x256xf32> to vector<16x256xf32>
    %c0_2 = arith.constant 0 : index
    %c0_3 = arith.constant 0 : index
    %2 = vector.load %arg3[%c0_2, %c0_3] : memref<16x1xf32, #tpu.memory_space<vmem>>, vector<16x1xf32>
    %3 = vector.broadcast %2 : vector<16x1xf32> to vector<16x256xf32>
    %4 = arith.mulf %1, %3 : vector<16x256xf32>
    %c0_4 = arith.constant 0 : index
    %c0_5 = arith.constant 0 : index
    %5 = vector.load %arg4[%c0_4, %c0_5] : memref<16x1xf32, #tpu.memory_space<vmem>>, vector<16x1xf32>
    %6 = vector.broadcast %5 : vector<16x1xf32> to vector<16x256xf32>
    %7 = arith.addf %4, %6 : vector<16x256xf32>
    %cst = arith.constant 0.000000e+00 : f32
    %8 = vector.broadcast %cst : f32 to vector<16x256xf32>
    %9 = arith.maximumf %7, %8 : vector<16x256xf32>
    %c0_6 = arith.constant 0 : index
    %c0_7 = arith.constant 0 : index
    %c0_8 = arith.constant 0 : index
    %10 = vector.load %arg5[%c0_6, %c0_7, %c0_8] : memref<1x16x256xf32, #tpu.memory_space<vmem>>, vector<1x16x256xf32>
    %11 = vector.shape_cast %10 : vector<1x16x256xf32> to vector<16x256xf32>
    %12 = vector.shape_cast %9 : vector<16x256xf32> to vector<1x16x256xf32>
    tpu.vector_store %arg5[%c0_6, %c0_7, %c0_8], %12 {strides = array<i32>} : memref<1x16x256xf32, #tpu.memory_space<vmem>>, vector<1x16x256xf32>,
    return
  }
  func.func @transform_0(%arg0: i32, %arg1: i32) -> (i32, i32, i32) {
    %c0_i32 = arith.constant 0 : i32
    %c0_i32_0 = arith.constant 0 : i32
    return %arg0, %c0_i32, %arg1 : i32, i32, i32
  }
  func.func @transform_1(%arg0: i32, %arg1: i32) -> (i32, i32) {
    %c0_i32 = arith.constant 0 : i32
    %c0_i32_0 = arith.constant 0 : i32
    %c0_i32_1 = arith.constant 0 : i32
    return %c0_i32, %c0_i32_0 : i32, i32
  }
  func.func @transform_2(%arg0: i32, %arg1: i32) -> (i32, i32) {
    %c0_i32 = arith.constant 0 : i32
    %c0_i32_0 = arith.constant 0 : i32
    %c0_i32_1 = arith.constant 0 : i32
    return %c0_i32, %c0_i32_0 : i32, i32
  }
  func.func @transform_3(%arg0: i32, %arg1: i32) -> (i32, i32, i32) {
    %c0_i32 = arith.constant 0 : i32
    %c0_i32_0 = arith.constant 0 : i32
    return %arg0, %c0_i32, %arg1 : i32, i32, i32
  }
}

</mosaic_0001>

<llo_original>
// kernel: conv2d_layer_forward.3
$region0: #{conv2d_layer_forward.3}
  #allocation0 [shape = 'u32[]', space=smem, size = 0x4, offset = 0x4, fixed_abs, tag = 'smem constant byte address 0x4 - core index']
  #allocation1 [shape = 'u32[144,128]{1,0:T(1,128)}', space=vmem, size = 0x12000, scoped, tag = 'internal scratch']
  %s0 = inlined_call_operand.vmem [shape: f32[2,16,256], index: 0, kind: input, shape index: {}, may-alias: {0,3}]
  %s1 = inlined_call_operand.vmem [shape: f32[16,1], index: 1, kind: input, shape index: {}]
  %s2 = inlined_call_operand.vmem [shape: f32[16,1], index: 2, kind: input, shape index: {}]
  %s3 = inlined_call_operand.vmem [shape: f32[2,16,256], index: 3, kind: output, shape index: {}, may-alias: {0,3}]
  %s4 = sld [smem:[#allocation0]]
  $region45: #{conv2d_layer_forward.3} parent=0
    _
  %s6 = ssub.s32 1, %s4
  %s7 = scalar_select 0, %s6, %s4
  loop: start=0, step=1, limit=4
  $region2: #{conv2d_layer_forward.3} parent=0 // loop_pre_header
    _
  $region3: #{conv2d_layer_forward.3} parent=0 // loop_header
    %s9 = sphi 0, %s13
    %p10 = scmp.ge.s32.totalorder %s9, 4
    %s16 = sphi 0, %s28
    %s17 = sphi 0, %s24
    %s18 = sphi 0, %s16
    %s19 = sphi 0, %s17
    %s20 = sphi 0, %s18
    %s21 = sphi 0, %s19
    %s33 = sphi 0, %s35
    %s36 = sphi 0, %s33
    %s37 = sphi 0, %s36
    %s53 = sphi 0, %s37
    %s57 = sphi 0, %s57
    %s59 = sphi 0, %s57
    %s60 = sphi 0, %s59
    %s74 = sphi 0, %s60
    %s78 = sphi 0, %s78
    %s80 = sphi 0, %s78
    %s81 = sphi 0, %s80
    %s95 = sphi 0, %s81
    %s103 = sphi 0, %s105
    %s106 = sphi 0, %s103
    %s107 = sphi 0, %s106
    %s123 = sphi 0, %s107
  $region4: #{conv2d_layer_forward.3} parent=0 // loop_header_branch
    %12 = sbr.rel (%p10) target = $region8
  $region5: #{conv2d_layer_forward.3} parent=0 // loop_body
    %s14 = ssub.s32 %s9, 1
    %s15 = ssub.s32 %s9, 2
    %s22 = sadd.s32 1, %s17
    %p23 = scmp.ge.s32.totalorder %s22, 1
    %s24 = scalar_select %p23, 0, %s22
    %s25 = sadd.s32 1, %s16
    %s26 = scalar_select %p23, %s25, %s16
    %p27 = scmp.ge.s32.totalorder %s26, 2
    %s28 = scalar_select %p27, 0, %s26
    %s29 = ssub.s32 %s16, %s28
    %s30 = ssub.s32 %s17, %s24
    %s31 = sor.u32 %s29, %s30
    %p32 = scmp.eq.s32.totalorder %s31, 0
    %s34 = sadd.s32 %s33, 1
    %s35 = scalar_select %p32, %s33, %s34
    %p38 = pneg %p32
    %p39 = scmp.eq.s32.totalorder %s9, 1
    %p40 = por %p38, %p39
    %p41 = scmp.ne.s32.totalorder %s33, %s36
    %p42 = scmp.eq.s32.totalorder %s9, 0
    %p43 = por %p41, %p42
    %p44 = scmp.ne.s32.totalorder %s33, %s36
    %p45 = scmp.eq.s32.totalorder %s14, 1
    %p46 = por %p44, %p45
    %p47 = scmp.ne.s32.totalorder %s36, %s37
    %p48 = scmp.eq.s32.totalorder %s14, 0
    %p49 = por %p47, %p48
    %p50 = scmp.ne.s32.totalorder %s36, %s37
    %p51 = scmp.eq.s32.totalorder %s15, 1
    %p52 = por %p50, %p51
    %p54 = scmp.ne.s32.totalorder %s37, %s53
    %p55 = scmp.eq.s32.totalorder %s15, 0
    %p56 = por %p54, %p55
    %s58 = sadd.s32 %s57, 1
    %p61 = scmp.eq.s32.totalorder %s9, 1
    %p62 = scmp.ne.s32.totalorder %s57, %s59
    %p63 = scmp.eq.s32.totalorder %s9, 0
    %p64 = por %p62, %p63
    %p65 = scmp.ne.s32.totalorder %s57, %s59
    %p66 = scmp.eq.s32.totalorder %s14, 1
    %p67 = por %p65, %p66
    %p68 = scmp.ne.s32.totalorder %s59, %s60
    %p69 = scmp.eq.s32.totalorder %s14, 0
    %p70 = por %p68, %p69
    %p71 = scmp.ne.s32.totalorder %s59, %s60
    %p72 = scmp.eq.s32.totalorder %s15, 1
    %p73 = por %p71, %p72
    %p75 = scmp.ne.s32.totalorder %s60, %s74
    %p76 = scmp.eq.s32.totalorder %s15, 0
    %p77 = por %p75, %p76
    %s79 = sadd.s32 %s78, 1
    %p82 = scmp.eq.s32.totalorder %s9, 1
    %p83 = scmp.ne.s32.totalorder %s78, %s80
    %p84 = scmp.eq.s32.totalorder %s9, 0
    %p85 = por %p83, %p84
    %p86 = scmp.ne.s32.totalorder %s78, %s80
    %p87 = scmp.eq.s32.totalorder %s14, 1
    %p88 = por %p86, %p87
    %p89 = scmp.ne.s32.totalorder %s80, %s81
    %p90 = scmp.eq.s32.totalorder %s14, 0
    %p91 = por %p89, %p90
    %p92 = scmp.ne.s32.totalorder %s80, %s81
    %p93 = scmp.eq.s32.totalorder %s15, 1
    %p94 = por %p92, %p93
    %p96 = scmp.ne.s32.totalorder %s81, %s95
    %p97 = scmp.eq.s32.totalorder %s15, 0
    %p98 = por %p96, %p97
    %s99 = ssub.s32 %s16, %s28
    %s100 = ssub.s32 %s17, %s24
    %s101 = sor.u32 %s99, %s100
    %p102 = scmp.eq.s32.totalorder %s101, 0
    %s104 = sadd.s32 %s103, 1
    %s105 = scalar_select %p102, %s103, %s104
    %p108 = pneg %p102
    %p109 = scmp.eq.s32.totalorder %s9, 1
    %p110 = por %p108, %p109
    %p111 = scmp.ne.s32.totalorder %s103, %s106
    %p112 = scmp.eq.s32.totalorder %s9, 0
    %p113 = por %p111, %p112
    %p114 = scmp.ne.s32.totalorder %s103, %s106
    %p115 = scmp.eq.s32.totalorder %s14, 1
    %p116 = por %p114, %p115
    %p117 = scmp.ne.s32.totalorder %s106, %s107
    %p118 = scmp.eq.s32.totalorder %s14, 0
    %p119 = por %p117, %p118
    %p120 = scmp.ne.s32.totalorder %s106, %s107
    %p121 = scmp.eq.s32.totalorder %s15, 1
    %p122 = por %p120, %p121
    %p124 = scmp.ne.s32.totalorder %s107, %s123
    %p125 = scmp.eq.s32.totalorder %s15, 0
    %p126 = por %p124, %p125
    %p127 = scmp.le.s32.totalorder 1, %s9
    %p128 = scmp.lt.s32.totalorder %s9, 3
    %p129 = pnand %p127, %p128
    %p130 = pneg %p129
    // Predicated region
    $region9: #{conv2d_layer_forward.3} parent=5 // pred_check
      _
    $region10: #{conv2d_layer_forward.3} parent=5 // pred_check_branch
      %132 = sbr.rel (%p129) target = $region12
    $region11: #{conv2d_layer_forward.3} parent=5 // pred_region
      %s133 = ssub.s32 %s9, 1
      // Predicated region
      $region13: #{conv2d_layer_forward.3} parent=11 // pred_check
        %p134 = pneg %p70
      $region14: #{conv2d_layer_forward.3} parent=11 // pred_check_branch
        %136 = sbr.rel (%p134) target = $region16
      $region15: #{conv2d_layer_forward.3} parent=11 // pred_region
        _
      $region16: #{conv2d_layer_forward.3} parent=11 // pred_fallthru
        _
      // Predicated region
      $region17: #{conv2d_layer_forward.3} parent=11 // pred_check
        %p137 = pneg %p91
      $region18: #{conv2d_layer_forward.3} parent=11 // pred_check_branch
        %139 = sbr.rel (%p137) target = $region20
      $region19: #{conv2d_layer_forward.3} parent=11 // pred_region
        _
      $region20: #{conv2d_layer_forward.3} parent=11 // pred_fallthru
        _
    $region12: #{conv2d_layer_forward.3} parent=5 // pred_fallthru
      _
    %p140 = scmp.lt.s32.totalorder %s9, 2
    // Predicated region
    $region21: #{conv2d_layer_forward.3} parent=5 // pred_check
      %p141 = pneg %p140
    $region22: #{conv2d_layer_forward.3} parent=5 // pred_check_branch
      %143 = sbr.rel (%p141) target = $region24
    $region23: #{conv2d_layer_forward.3} parent=5 // pred_region
      // Predicated region
      $region25: #{conv2d_layer_forward.3} parent=23 // pred_check
        %p144 = pneg %p43
      $region26: #{conv2d_layer_forward.3} parent=23 // pred_check_branch
        %146 = sbr.rel (%p144) target = $region28
      $region27: #{conv2d_layer_forward.3} parent=23 // pred_region
        %s147 = smul.u32 2, %s17
        %p148 = scmp.lt.s32.totalorder %s16, 1
        %s149 = scalar_select %p148, %s16, 1
        %p150 = scmp.lt.s32.totalorder %s147, 1
        %s151 = scalar_select %p150, %s147, 1
        %s152 = smul.addr %s149, 4
        %s153 = sadd.s32 %s151, %s152
        %s154 = smul.addr %s153, 8
        %s155 = scalar_lea.vmem %s0, %s154
        %s156 = smul.u32 2, %s17
      $region28: #{conv2d_layer_forward.3} parent=23 // pred_fallthru
        _
    $region24: #{conv2d_layer_forward.3} parent=5 // pred_fallthru
      _
    %p157 = scmp.le.s32.totalorder 1, %s9
    %p158 = scmp.lt.s32.totalorder %s9, 3
    %p159 = pnand %p157, %p158
    %p160 = pneg %p159
    // Predicated region
    $region29: #{conv2d_layer_forward.3} parent=5 // pred_check
      _
    $region30: #{conv2d_layer_forward.3} parent=5 // pred_check_branch
      %162 = sbr.rel (%p159) target = $region32
    $region31: #{conv2d_layer_forward.3} parent=5 // pred_region
      %s163 = ssub.s32 %s9, 1
      %s164 = smul.u32 2, %s19
      %p165 = scmp.lt.s32.totalorder %s18, 1
      %s166 = scalar_select %p165, %s18, 1
      %p167 = scmp.lt.s32.totalorder %s164, 1
      %s168 = scalar_select %p167, %s164, 1
      %s169 = smul.addr %s166, 4
      %s170 = sadd.s32 %s168, %s169
      %s171 = smul.addr %s170, 8
      %s172 = scalar_lea.vmem %s0, %s171
      %p173 = pneg %p49
      %p174 = pneg %p46
      %p175 = pneg %p70
      %p176 = pneg %p67
      %p177 = pneg %p91
      %p178 = pneg %p88
      %p179 = pneg %p119
      %p180 = pneg %p116
      %s181 = smul.u32 2, %s19
      %p182 = scmp.lt.s32.totalorder %s18, 1
      %s183 = scalar_select %p182, %s18, 1
      %p184 = scmp.lt.s32.totalorder %s181, 1
      %s185 = scalar_select %p184, %s181, 1
      %s186 = smul.addr %s183, 4
      %s187 = sadd.s32 %s185, %s186
      %s188 = smul.addr %s187, 8
      %s189 = scalar_lea.vmem %s3, %s188
      %s190 = smul.u32 2, %s19
      %p191 = scmp.lt.s32.totalorder %s18, 1
      %s192 = scalar_select %p191, %s18, 1
      %p193 = scmp.lt.s32.totalorder %s190, 1
      %s194 = scalar_select %p193, %s190, 1
      %s195 = smul.addr %s192, 4
      %s196 = sadd.s32 %s194, %s195
      %s197 = smul.addr %s196, 8
      %s198 = scalar_lea.vmem %s0, %s197
      %s199 = smul.u32 2, %s19
      %s200 = smul.u32 2, %s19
      %p201 = scmp.lt.s32.totalorder %s18, 1
      %s202 = scalar_select %p201, %s18, 1
      %p203 = scmp.lt.s32.totalorder %s200, 1
      %s204 = scalar_select %p203, %s200, 1
      %s205 = smul.addr %s202, 4
      %s206 = sadd.s32 %s204, %s205
      %s207 = smul.addr %s206, 8
      %s208 = scalar_lea.vmem %s3, %s207
      %s209 = smul.u32 2, %s19
      %v210 = vld [vmem:[%s198] sm:$0xff]
      %v211 = vld [vmem:[%s198 + $0x8] sm:$0xff]
      %v212 = vld [vmem:[%s198 + $0x10] sm:$0xff]
      %v213 = vld [vmem:[%s198 + $0x18] sm:$0xff]
      %v214 = vld [vmem:[%s1] sm:$0xff]
      %v215 = vld [vmem:[%s1 + $0x8] sm:$0xff]
      %217 = vset.pattern.permute.xlu0 0
      %218 = vperm.xlu0 %217, %v214
      %v219 = vpop.permute.xlu0 %218
      %222 = vset.pattern.permute.xlu0 0
      %223 = vperm.xlu0 %222, %v215
      %v224 = vpop.permute.xlu0 %223
      %v226 = vmul.f32 %v210, %v219
      %v227 = vmul.f32 %v211, %v219
      %v228 = vmul.f32 %v212, %v224
      %v229 = vmul.f32 %v213, %v224
      %v230 = vld [vmem:[%s2] sm:$0xff]
      %v231 = vld [vmem:[%s2 + $0x8] sm:$0xff]
      %233 = vset.pattern.permute.xlu0 0
      %234 = vperm.xlu0 %233, %v230
      %v235 = vpop.permute.xlu0 %234
      %238 = vset.pattern.permute.xlu0 0
      %239 = vperm.xlu0 %238, %v231
      %v240 = vpop.permute.xlu0 %239
      %v242 = vadd.f32 %v226, %v235
      %v243 = vadd.f32 %v227, %v235
      %v244 = vadd.f32 %v228, %v240
      %v245 = vadd.f32 %v229, %v240
      %v246 = vmax.f32 %v242, 0.0
      %v247 = vmax.f32 %v243, 0.0
      %v248 = vmax.f32 %v244, 0.0
      %v249 = vmax.f32 %v245, 0.0
      %250 = vst [vmem:[%s208] sm:$0xff] %v246
      %251 = vst [vmem:[%s208 + $0x8] sm:$0xff] %v247
      %252 = vst [vmem:[%s208 + $0x10] sm:$0xff] %v248
      %253 = vst [vmem:[%s208 + $0x18] sm:$0xff] %v249
      %s254 = smul.u32 2, %s19
      %p255 = scmp.lt.s32.totalorder %s18, 1
      %s256 = scalar_select %p255, %s18, 1
      %p257 = scmp.lt.s32.totalorder %s254, 1
      %s258 = scalar_select %p257, %s254, 1
      %s259 = smul.addr %s256, 4
      %s260 = sadd.s32 %s258, %s259
      %s261 = smul.addr %s260, 8
      %s262 = scalar_lea.vmem %s3, %s261
      // Predicated region
      $region33: #{conv2d_layer_forward.3} parent=31 // pred_check
        %p263 = pneg %p116
      $region34: #{conv2d_layer_forward.3} parent=31 // pred_check_branch
        %265 = sbr.rel (%p263) target = $region36
      $region35: #{conv2d_layer_forward.3} parent=31 // pred_region
        %s266 = smul.u32 2, %s19
      $region36: #{conv2d_layer_forward.3} parent=31 // pred_fallthru
        _
    $region32: #{conv2d_layer_forward.3} parent=5 // pred_fallthru
      _
    %p267 = scmp.le.s32.totalorder 2, %s9
    // Predicated region
    $region37: #{conv2d_layer_forward.3} parent=5 // pred_check
      %p268 = pneg %p267
    $region38: #{conv2d_layer_forward.3} parent=5 // pred_check_branch
      %270 = sbr.rel (%p268) target = $region40
    $region39: #{conv2d_layer_forward.3} parent=5 // pred_region
      %s271 = ssub.s32 %s9, 2
      // Predicated region
      $region41: #{conv2d_layer_forward.3} parent=39 // pred_check
        %p272 = pneg %p122
      $region42: #{conv2d_layer_forward.3} parent=39 // pred_check_branch
        %274 = sbr.rel (%p272) target = $region44
      $region43: #{conv2d_layer_forward.3} parent=39 // pred_region
        %s275 = smul.u32 2, %s21
        %p276 = scmp.lt.s32.totalorder %s20, 1
        %s277 = scalar_select %p276, %s20, 1
        %p278 = scmp.lt.s32.totalorder %s275, 1
        %s279 = scalar_select %p278, %s275, 1
        %s280 = smul.addr %s277, 4
        %s281 = sadd.s32 %s279, %s280
        %s282 = smul.addr %s281, 8
        %s283 = scalar_lea.vmem %s3, %s282
      $region44: #{conv2d_layer_forward.3} parent=39 // pred_fallthru
        _
    $region40: #{conv2d_layer_forward.3} parent=5 // pred_fallthru
      _
  $region6: #{conv2d_layer_forward.3} parent=0 // loop_footer
    %s13 = sadd.s32 1, %s9
  $region7: #{conv2d_layer_forward.3} parent=0 // loop_footer_branch
    %8 = sbr.rel target = $region3
  $region8: #{conv2d_layer_forward.3} parent=0 // loop_exit
    _

// kernel: conv2d_layer_forward.2
$region0: #{conv2d_layer_forward.2}
  #allocation0 [shape = 'u32[]', space=smem, size = 0x4, offset = 0x4, fixed_abs, tag = 'smem constant byte address 0x4 - core index']
  #allocation1 [shape = 'u32[144,128]{1,0:T(1,128)}', space=vmem, size = 0x12000, scoped, tag = 'internal scratch']
  %s0 = inlined_call_operand.vmem [shape: f32[2,48,256], index: 0, kind: input, shape index: {}]
  %s1 = inlined_call_operand.vmem [shape: f32[16,48], index: 1, kind: input, shape index: {}]
  %s2 = inlined_call_operand.vmem [shape: f32[2,16,256], index: 2, kind: output, shape index: {0}]
  %s3 = inlined_call_operand.vmem [shape: f32[2,1,16,1], index: 3, kind: output, shape index: {1}]
  %s4 = inlined_call_operand.vmem [shape: f32[2,1,16,1], index: 4, kind: output, shape index: {2}]
  %5 = xla_tuple %s2, %s3, %s4
  %s6 = sld [smem:[#allocation0]]
  $region57: #{conv2d_layer_forward.2} parent=0
    _
  %s8 = ssub.s32 1, %s6
  %s9 = scalar_select 0, %s8, %s6
  loop: start=0, step=1, limit=4
  $region2: #{conv2d_layer_forward.2} parent=0 // loop_pre_header
    _
  $region3: #{conv2d_layer_forward.2} parent=0 // loop_header
    %s11 = sphi 0, %s15
    %p12 = scmp.ge.s32.totalorder %s11, 4
    %s18 = sphi 0, %s30
    %s19 = sphi 0, %s26
    %s20 = sphi 0, %s18
    %s21 = sphi 0, %s19
    %s22 = sphi 0, %s20
    %s23 = sphi 0, %s21
    %s35 = sphi 0, %s37
    %s38 = sphi 0, %s35
    %s39 = sphi 0, %s38
    %s55 = sphi 0, %s39
    %s59 = sphi 0, %s59
    %s61 = sphi 0, %s59
    %s62 = sphi 0, %s61
    %s76 = sphi 0, %s62
    %s84 = sphi 0, %s86
    %s87 = sphi 0, %s84
    %s88 = sphi 0, %s87
    %s104 = sphi 0, %s88
    %s112 = sphi 0, %s114
    %s115 = sphi 0, %s112
    %s116 = sphi 0, %s115
    %s132 = sphi 0, %s116
    %s140 = sphi 0, %s142
    %s143 = sphi 0, %s140
    %s144 = sphi 0, %s143
    %s160 = sphi 0, %s144
  $region4: #{conv2d_layer_forward.2} parent=0 // loop_header_branch
    %14 = sbr.rel (%p12) target = $region8
  $region5: #{conv2d_layer_forward.2} parent=0 // loop_body
    %s16 = ssub.s32 %s11, 1
    %s17 = ssub.s32 %s11, 2
    %s24 = sadd.s32 1, %s19
    %p25 = scmp.ge.s32.totalorder %s24, 1
    %s26 = scalar_select %p25, 0, %s24
    %s27 = sadd.s32 1, %s18
    %s28 = scalar_select %p25, %s27, %s18
    %p29 = scmp.ge.s32.totalorder %s28, 2
    %s30 = scalar_select %p29, 0, %s28
    %s31 = ssub.s32 %s18, %s30
    %s32 = ssub.s32 %s19, %s26
    %s33 = sor.u32 %s31, %s32
    %p34 = scmp.eq.s32.totalorder %s33, 0
    %s36 = sadd.s32 %s35, 1
    %s37 = scalar_select %p34, %s35, %s36
    %p40 = pneg %p34
    %p41 = scmp.eq.s32.totalorder %s11, 1
    %p42 = por %p40, %p41
    %p43 = scmp.ne.s32.totalorder %s35, %s38
    %p44 = scmp.eq.s32.totalorder %s11, 0
    %p45 = por %p43, %p44
    %p46 = scmp.ne.s32.totalorder %s35, %s38
    %p47 = scmp.eq.s32.totalorder %s16, 1
    %p48 = por %p46, %p47
    %p49 = scmp.ne.s32.totalorder %s38, %s39
    %p50 = scmp.eq.s32.totalorder %s16, 0
    %p51 = por %p49, %p50
    %p52 = scmp.ne.s32.totalorder %s38, %s39
    %p53 = scmp.eq.s32.totalorder %s17, 1
    %p54 = por %p52, %p53
    %p56 = scmp.ne.s32.totalorder %s39, %s55
    %p57 = scmp.eq.s32.totalorder %s17, 0
    %p58 = por %p56, %p57
    %s60 = sadd.s32 %s59, 1
    %p63 = scmp.eq.s32.totalorder %s11, 1
    %p64 = scmp.ne.s32.totalorder %s59, %s61
    %p65 = scmp.eq.s32.totalorder %s11, 0
    %p66 = por %p64, %p65
    %p67 = scmp.ne.s32.totalorder %s59, %s61
    %p68 = scmp.eq.s32.totalorder %s16, 1
    %p69 = por %p67, %p68
    %p70 = scmp.ne.s32.totalorder %s61, %s62
    %p71 = scmp.eq.s32.totalorder %s16, 0
    %p72 = por %p70, %p71
    %p73 = scmp.ne.s32.totalorder %s61, %s62
    %p74 = scmp.eq.s32.totalorder %s17, 1
    %p75 = por %p73, %p74
    %p77 = scmp.ne.s32.totalorder %s62, %s76
    %p78 = scmp.eq.s32.totalorder %s17, 0
    %p79 = por %p77, %p78
    %s80 = ssub.s32 %s18, %s30
    %s81 = ssub.s32 %s19, %s26
    %s82 = sor.u32 %s80, %s81
    %p83 = scmp.eq.s32.totalorder %s82, 0
    %s85 = sadd.s32 %s84, 1
    %s86 = scalar_select %p83, %s84, %s85
    %p89 = pneg %p83
    %p90 = scmp.eq.s32.totalorder %s11, 1
    %p91 = por %p89, %p90
    %p92 = scmp.ne.s32.totalorder %s84, %s87
    %p93 = scmp.eq.s32.totalorder %s11, 0
    %p94 = por %p92, %p93
    %p95 = scmp.ne.s32.totalorder %s84, %s87
    %p96 = scmp.eq.s32.totalorder %s16, 1
    %p97 = por %p95, %p96
    %p98 = scmp.ne.s32.totalorder %s87, %s88
    %p99 = scmp.eq.s32.totalorder %s16, 0
    %p100 = por %p98, %p99
    %p101 = scmp.ne.s32.totalorder %s87, %s88
    %p102 = scmp.eq.s32.totalorder %s17, 1
    %p103 = por %p101, %p102
    %p105 = scmp.ne.s32.totalorder %s88, %s104
    %p106 = scmp.eq.s32.totalorder %s17, 0
    %p107 = por %p105, %p106
    %s108 = ssub.s32 %s18, %s30
    %s109 = ssub.s32 %s19, %s26
    %s110 = sor.u32 %s108, %s109
    %p111 = scmp.eq.s32.totalorder %s110, 0
    %s113 = sadd.s32 %s112, 1
    %s114 = scalar_select %p111, %s112, %s113
    %p117 = pneg %p111
    %p118 = scmp.eq.s32.totalorder %s11, 1
    %p119 = por %p117, %p118
    %p120 = scmp.ne.s32.totalorder %s112, %s115
    %p121 = scmp.eq.s32.totalorder %s11, 0
    %p122 = por %p120, %p121
    %p123 = scmp.ne.s32.totalorder %s112, %s115
    %p124 = scmp.eq.s32.totalorder %s16, 1
    %p125 = por %p123, %p124
    %p126 = scmp.ne.s32.totalorder %s115, %s116
    %p127 = scmp.eq.s32.totalorder %s16, 0
    %p128 = por %p126, %p127
    %p129 = scmp.ne.s32.totalorder %s115, %s116
    %p130 = scmp.eq.s32.totalorder %s17, 1
    %p131 = por %p129, %p130
    %p133 = scmp.ne.s32.totalorder %s116, %s132
    %p134 = scmp.eq.s32.totalorder %s17, 0
    %p135 = por %p133, %p134
    %s136 = ssub.s32 %s18, %s30
    %s137 = ssub.s32 %s19, %s26
    %s138 = sor.u32 %s136, %s137
    %p139 = scmp.eq.s32.totalorder %s138, 0
    %s141 = sadd.s32 %s140, 1
    %s142 = scalar_select %p139, %s140, %s141
    %p145 = pneg %p139
    %p146 = scmp.eq.s32.totalorder %s11, 1
    %p147 = por %p145, %p146
    %p148 = scmp.ne.s32.totalorder %s140, %s143
    %p149 = scmp.eq.s32.totalorder %s11, 0
    %p150 = por %p148, %p149
    %p151 = scmp.ne.s32.totalorder %s140, %s143
    %p152 = scmp.eq.s32.totalorder %s16, 1
    %p153 = por %p151, %p152
    %p154 = scmp.ne.s32.totalorder %s143, %s144
    %p155 = scmp.eq.s32.totalorder %s16, 0
    %p156 = por %p154, %p155
    %p157 = scmp.ne.s32.totalorder %s143, %s144
    %p158 = scmp.eq.s32.totalorder %s17, 1
    %p159 = por %p157, %p158
    %p161 = scmp.ne.s32.totalorder %s144, %s160
    %p162 = scmp.eq.s32.totalorder %s17, 0
    %p163 = por %p161, %p162
    %p164 = scmp.le.s32.totalorder 1, %s11
    %p165 = scmp.lt.s32.totalorder %s11, 3
    %p166 = pnand %p164, %p165
    %p167 = pneg %p166
    // Predicated region
    $region9: #{conv2d_layer_forward.2} parent=5 // pred_check
      _
    $region10: #{conv2d_layer_forward.2} parent=5 // pred_check_branch
      %169 = sbr.rel (%p166) target = $region12
    $region11: #{conv2d_layer_forward.2} parent=5 // pred_region
      %s170 = ssub.s32 %s11, 1
      // Predicated region
      $region13: #{conv2d_layer_forward.2} parent=11 // pred_check
        %p171 = pneg %p72
      $region14: #{conv2d_layer_forward.2} parent=11 // pred_check_branch
        %173 = sbr.rel (%p171) target = $region16
      $region15: #{conv2d_layer_forward.2} parent=11 // pred_region
        _
      $region16: #{conv2d_layer_forward.2} parent=11 // pred_fallthru
        _
    $region12: #{conv2d_layer_forward.2} parent=5 // pred_fallthru
      _
    %p174 = scmp.lt.s32.totalorder %s11, 2
    // Predicated region
    $region17: #{conv2d_layer_forward.2} parent=5 // pred_check
      %p175 = pneg %p174
    $region18: #{conv2d_layer_forward.2} parent=5 // pred_check_branch
      %177 = sbr.rel (%p175) target = $region20
    $region19: #{conv2d_layer_forward.2} parent=5 // pred_region
      // Predicated region
      $region21: #{conv2d_layer_forward.2} parent=19 // pred_check
        %p178 = pneg %p45
      $region22: #{conv2d_layer_forward.2} parent=19 // pred_check_branch
        %180 = sbr.rel (%p178) target = $region24
      $region23: #{conv2d_layer_forward.2} parent=19 // pred_region
        %s181 = smul.u32 2, %s19
        %p182 = scmp.lt.s32.totalorder %s18, 1
        %s183 = scalar_select %p182, %s18, 1
        %p184 = scmp.lt.s32.totalorder %s181, 1
        %s185 = scalar_select %p184, %s181, 1
        %s186 = smul.addr %s183, 12
        %s187 = sadd.s32 %s185, %s186
        %s188 = smul.addr %s187, 8
        %s189 = scalar_lea.vmem %s0, %s188
        %s190 = smul.u32 2, %s19
      $region24: #{conv2d_layer_forward.2} parent=19 // pred_fallthru
        _
    $region20: #{conv2d_layer_forward.2} parent=5 // pred_fallthru
      _
    %p191 = scmp.le.s32.totalorder 1, %s11
    %p192 = scmp.lt.s32.totalorder %s11, 3
    %p193 = pnand %p191, %p192
    %p194 = pneg %p193
    // Predicated region
    $region25: #{conv2d_layer_forward.2} parent=5 // pred_check
      _
    $region26: #{conv2d_layer_forward.2} parent=5 // pred_check_branch
      %196 = sbr.rel (%p193) target = $region28
    $region27: #{conv2d_layer_forward.2} parent=5 // pred_region
      %s197 = ssub.s32 %s11, 1
      %s198 = smul.u32 2, %s21
      %p199 = scmp.lt.s32.totalorder %s20, 1
      %s200 = scalar_select %p199, %s20, 1
      %p201 = scmp.lt.s32.totalorder %s198, 1
      %s202 = scalar_select %p201, %s198, 1
      %s203 = smul.addr %s200, 12
      %s204 = sadd.s32 %s202, %s203
      %s205 = smul.addr %s204, 8
      %s206 = scalar_lea.vmem %s0, %s205
      %p207 = pneg %p51
      %p208 = pneg %p48
      %p209 = pneg %p72
      %p210 = pneg %p69
      %p211 = pneg %p100
      %p212 = pneg %p97
      %s213 = smul.u32 2, %s21
      %p214 = scmp.lt.s32.totalorder %s20, 1
      %s215 = scalar_select %p214, %s20, 1
      %p216 = scmp.lt.s32.totalorder %s213, 1
      %s217 = scalar_select %p216, %s213, 1
      %s218 = smul.addr %s215, 4
      %s219 = sadd.s32 %s217, %s218
      %s220 = smul.addr %s219, 8
      %s221 = scalar_lea.vmem %s2, %s220
      %p222 = pneg %p128
      %p223 = pneg %p125
      %p224 = scmp.lt.s32.totalorder %s20, 1
      %s225 = scalar_select %p224, %s20, 1
      %p226 = scmp.lt.s32.totalorder %s21, 0
      %s227 = scalar_select %p226, %s21, 0
      %s228 = smul.addr %s227, 2
      %s229 = smul.addr %s225, 2
      %s230 = sadd.s32 %s228, %s229
      %s231 = smul.addr %s230, 8
      %s232 = scalar_lea.vmem %s3, %s231
      %p233 = pneg %p156
      %p234 = pneg %p153
      %p235 = scmp.lt.s32.totalorder %s20, 1
      %s236 = scalar_select %p235, %s20, 1
      %p237 = scmp.lt.s32.totalorder %s21, 0
      %s238 = scalar_select %p237, %s21, 0
      %s239 = smul.addr %s238, 2
      %s240 = smul.addr %s236, 2
      %s241 = sadd.s32 %s239, %s240
      %s242 = smul.addr %s241, 8
      %s243 = scalar_lea.vmem %s4, %s242
      %s244 = smul.u32 2, %s21
      %p245 = scmp.lt.s32.totalorder %s20, 1
      %s246 = scalar_select %p245, %s20, 1
      %p247 = scmp.lt.s32.totalorder %s244, 1
      %s248 = scalar_select %p247, %s244, 1
      %s249 = smul.addr %s246, 12
      %s250 = sadd.s32 %s248, %s249
      %s251 = smul.addr %s250, 8
      %s252 = scalar_lea.vmem %s0, %s251
      %s253 = smul.u32 2, %s21
      %s254 = smul.u32 2, %s21
      %p255 = scmp.lt.s32.totalorder %s20, 1
      %s256 = scalar_select %p255, %s20, 1
      %p257 = scmp.lt.s32.totalorder %s254, 1
      %s258 = scalar_select %p257, %s254, 1
      %s259 = smul.addr %s256, 4
      %s260 = sadd.s32 %s258, %s259
      %s261 = smul.addr %s260, 8
      %s262 = scalar_lea.vmem %s2, %s261
      %s263 = smul.u32 2, %s21
      %p264 = scmp.lt.s32.totalorder %s20, 1
      %s265 = scalar_select %p264, %s20, 1
      %p266 = scmp.lt.s32.totalorder %s21, 0
      %s267 = scalar_select %p266, %s21, 0
      %s268 = smul.addr %s267, 2
      %s269 = smul.addr %s265, 2
      %s270 = sadd.s32 %s268, %s269
      %s271 = smul.addr %s270, 8
      %s272 = scalar_lea.vmem %s3, %s271
      %p273 = scmp.lt.s32.totalorder %s20, 1
      %s274 = scalar_select %p273, %s20, 1
      %p275 = scmp.lt.s32.totalorder %s21, 0
      %s276 = scalar_select %p275, %s21, 0
      %s277 = smul.addr %s276, 2
      %s278 = smul.addr %s274, 2
      %s279 = sadd.s32 %s277, %s278
      %s280 = smul.addr %s279, 8
      %s281 = scalar_lea.vmem %s4, %s280
      %v282 = vld [vmem:[%s1] sm:$0xff]
      %v283 = vld [vmem:[%s1 + $0x8] sm:$0xff]
      %v284 = vld [vmem:[%s252] sm:$0xff]
      %v285 = vld [vmem:[%s252 + $0x8] sm:$0xff]
      %v286 = vld [vmem:[%s252 + $0x10] sm:$0xff]
      %v287 = vld [vmem:[%s252 + $0x18] sm:$0xff]
      %v288 = vld [vmem:[%s252 + $0x20] sm:$0xff]
      %v289 = vld [vmem:[%s252 + $0x28] sm:$0xff]
      %v290 = vld [vmem:[%s252 + $0x30] sm:$0xff]
      %v291 = vld [vmem:[%s252 + $0x38] sm:$0xff]
      %v292 = vld [vmem:[%s252 + $0x40] sm:$0xff]
      %v293 = vld [vmem:[%s252 + $0x48] sm:$0xff]
      %v294 = vld [vmem:[%s252 + $0x50] sm:$0xff]
      %v295 = vld [vmem:[%s252 + $0x58] sm:$0xff]
      %vm296 = vcmask 392192
      %v298 = vsel %vm296, %v282, 0
      %v301 = vsel %vm296, %v283, 0
      %303 = vmatprep.subr.mxu0 %v285
      %304 = vmatpush1.msra.mxu0 %v284
      %305 = vmatprep.subr.mxu0 %v287
      %306 = vmatpush1.msra.mxu0 %v286
      %307 = vmatprep.subr.mxu0 %v289
      %308 = vmatpush1.msra.mxu0 %v288
      %309 = vmatprep.subr.mxu0 %v291
      %310 = vmatpush1.msra.mxu0 %v290
      %311 = vmatprep.subr.mxu0 %v293
      %312 = vmatpush1.msra.mxu0 %v292
      %313 = vmatprep.subr.mxu0 %v295
      %314 = vmatpush1.msra.mxu0 %v294
      %315 = vmatprep.subr.mxu0 0.0
      %316 = vmatpush1.msra.mxu0 0.0
      %317 = vmatprep.subr.mxu0 0.0
      %318 = vmatpush1.msra.mxu0 0.0
      %319 = vmatprep.subr.mxu0 0.0
      %320 = vmatpush1.msra.mxu0 0.0
      %321 = vmatprep.subr.mxu0 0.0
      %322 = vmatpush1.msra.mxu0 0.0
      %323 = vmatprep.subr.mxu0 0.0
      %324 = vmatpush1.msra.mxu0 0.0
      %325 = vmatprep.subr.mxu0 0.0
      %326 = vmatpush1.msra.mxu0 0.0
      %327 = vmatprep.subr.mxu0 0.0
      %328 = vmatpush1.msra.mxu0 0.0
      %329 = vmatprep.subr.mxu0 0.0
      %330 = vmatpush1.msra.mxu0 0.0
      %331 = vmatprep.subr.mxu0 0.0
      %332 = vmatpush1.msra.mxu0 0.0
      %333 = vmatprep.subr.mxu0 0.0
      %334 = vmatpush1.msra.mxu0 0.0
      %335 = vmatprep.subr.mxu0 0.0
      %336 = vmatpush1.msra.mxu0 0.0
      %337 = vmatprep.subr.mxu0 0.0
      %338 = vmatpush1.msra.mxu0 0.0
      %339 = vmatprep.subr.mxu0 0.0
      %340 = vmatpush1.msra.mxu0 0.0
      %341 = vmatprep.subr.mxu0 0.0
      %342 = vmatpush1.msra.mxu0 0.0
      %343 = vmatprep.subr.mxu0 0.0
      %344 = vmatpush1.msra.mxu0 0.0
      %345 = vmatprep.subr.mxu0 0.0
      %346 = vmatpush1.msra.mxu0 0.0
      %347 = vmatprep.subr.mxu0 0.0
      %348 = vmatpush1.msra.mxu0 0.0
      %349 = vmatprep.subr.mxu0 0.0
      %350 = vmatpush1.msra.mxu0 0.0
      %351 = vmatprep.subr.mxu0 0.0
      %352 = vmatpush1.msra.mxu0 0.0
      %353 = vmatprep.subr.mxu0 0.0
      %354 = vmatpush1.msra.mxu0 0.0
      %355 = vmatprep.subr.mxu0 0.0
      %356 = vmatpush1.msra.mxu0 0.0
      %357 = vmatprep.subr.mxu0 0.0
      %358 = vmatpush1.msra.mxu0 0.0
      %359 = vmatprep.subr.mxu0 0.0
      %360 = vmatpush1.msra.mxu0 0.0
      %361 = vmatprep.subr.mxu0 0.0
      %362 = vmatpush1.msra.mxu0 0.0
      %363 = vmatprep.subr.mxu0 0.0
      %364 = vmatpush1.msra.mxu0 0.0
      %365 = vmatprep.subr.mxu0 0.0
      %366 = vmatpush1.msra.mxu0 0.0
      %367 = vmatprep.mubr.f32.mxu0 0.0
      %368 = vmatmul.mubr.f32.gmra.mrb[0].mxu0 %v298
      %v369 = vpop.f32.mrb[0].mxu0
      %v370 = vadd.f32 0.0, %v369
      %v371 = vpop.f32.mrb[0].mxu0
      %v372 = vadd.f32 0.0, %v371
      %373 = vmatprep.mubr.f32.mxu0 0.0
      %374 = vmatmul.mubr.f32.gmra.mrb[0].mxu0 %v301
      %v375 = vpop.f32.mrb[0].mxu0
      %v376 = vadd.f32 0.0, %v375
      %v377 = vpop.f32.mrb[0].mxu0
      %v378 = vadd.f32 0.0, %v377
      %379 = vdwg.mxu0
      %380 = vst [vmem:[%s262] sm:$0xff] %v370
      %381 = vst [vmem:[%s262 + $0x8] sm:$0xff] %v372
      %382 = vst [vmem:[%s262 + $0x10] sm:$0xff] %v376
      %383 = vst [vmem:[%s262 + $0x18] sm:$0xff] %v378
      %v384 = vadd.f32 %v370, %v372
      %385 = vadd.xlane.f32.xlu0 %v384
      %v386 = vpop.xlane.xlu0 %385
      %v387 = vadd.f32 %v376, %v378
      %388 = vadd.xlane.f32.xlu0 %v387
      %v389 = vpop.xlane.xlu0 %388
      %vm390 = vcmask 7168
      %391 = vst.msk [vmem:[%s272] sm:$0xff] %vm390, %v386
      %392 = vst.msk [vmem:[%s272 + $0x8] sm:$0xff] %vm390, %v389
      %v393 = vmul.f32 %v370, %v370
      %v394 = vmul.f32 %v372, %v372
      %v395 = vmul.f32 %v376, %v376
      %v396 = vmul.f32 %v378, %v378
      %v397 = vadd.f32 %v393, %v394
      %398 = vadd.xlane.f32.xlu0 %v397
      %v399 = vpop.xlane.xlu0 %398
      %v400 = vadd.f32 %v395, %v396
      %401 = vadd.xlane.f32.xlu0 %v400
      %v402 = vpop.xlane.xlu0 %401
      %403 = vst.msk [vmem:[%s281] sm:$0xff] %vm390, %v399
      %404 = vst.msk [vmem:[%s281 + $0x8] sm:$0xff] %vm390, %v402
      %s405 = smul.u32 2, %s21
      %p406 = scmp.lt.s32.totalorder %s20, 1
      %s407 = scalar_select %p406, %s20, 1
      %p408 = scmp.lt.s32.totalorder %s405, 1
      %s409 = scalar_select %p408, %s405, 1
      %s410 = smul.addr %s407, 4
      %s411 = sadd.s32 %s409, %s410
      %s412 = smul.addr %s411, 8
      %s413 = scalar_lea.vmem %s2, %s412
      %p414 = scmp.lt.s32.totalorder %s20, 1
      %s415 = scalar_select %p414, %s20, 1
      %p416 = scmp.lt.s32.totalorder %s21, 0
      %s417 = scalar_select %p416, %s21, 0
      %s418 = smul.addr %s417, 2
      %s419 = smul.addr %s415, 2
      %s420 = sadd.s32 %s418, %s419
      %s421 = smul.addr %s420, 8
      %s422 = scalar_lea.vmem %s3, %s421
      %p423 = scmp.lt.s32.totalorder %s20, 1
      %s424 = scalar_select %p423, %s20, 1
      %p425 = scmp.lt.s32.totalorder %s21, 0
      %s426 = scalar_select %p425, %s21, 0
      %s427 = smul.addr %s426, 2
      %s428 = smul.addr %s424, 2
      %s429 = sadd.s32 %s427, %s428
      %s430 = smul.addr %s429, 8
      %s431 = scalar_lea.vmem %s4, %s430
      // Predicated region
      $region29: #{conv2d_layer_forward.2} parent=27 // pred_check
        %p432 = pneg %p97
      $region30: #{conv2d_layer_forward.2} parent=27 // pred_check_branch
        %434 = sbr.rel (%p432) target = $region32
      $region31: #{conv2d_layer_forward.2} parent=27 // pred_region
        %s435 = smul.u32 2, %s21
      $region32: #{conv2d_layer_forward.2} parent=27 // pred_fallthru
        _
      // Predicated region
      $region33: #{conv2d_layer_forward.2} parent=27 // pred_check
        %p436 = pneg %p125
      $region34: #{conv2d_layer_forward.2} parent=27 // pred_check_branch
        %438 = sbr.rel (%p436) target = $region36
      $region35: #{conv2d_layer_forward.2} parent=27 // pred_region
        _
      $region36: #{conv2d_layer_forward.2} parent=27 // pred_fallthru
        _
      // Predicated region
      $region37: #{conv2d_layer_forward.2} parent=27 // pred_check
        %p439 = pneg %p153
      $region38: #{conv2d_layer_forward.2} parent=27 // pred_check_branch
        %441 = sbr.rel (%p439) target = $region40
      $region39: #{conv2d_layer_forward.2} parent=27 // pred_region
        _
      $region40: #{conv2d_layer_forward.2} parent=27 // pred_fallthru
        _
    $region28: #{conv2d_layer_forward.2} parent=5 // pred_fallthru
      _
    %p442 = scmp.le.s32.totalorder 2, %s11
    // Predicated region
    $region41: #{conv2d_layer_forward.2} parent=5 // pred_check
      %p443 = pneg %p442
    $region42: #{conv2d_layer_forward.2} parent=5 // pred_check_branch
      %445 = sbr.rel (%p443) target = $region44
    $region43: #{conv2d_layer_forward.2} parent=5 // pred_region
      %s446 = ssub.s32 %s11, 2
      // Predicated region
      $region45: #{conv2d_layer_forward.2} parent=43 // pred_check
        %p447 = pneg %p103
      $region46: #{conv2d_layer_forward.2} parent=43 // pred_check_branch
        %449 = sbr.rel (%p447) target = $region48
      $region47: #{conv2d_layer_forward.2} parent=43 // pred_region
        %s450 = smul.u32 2, %s23
        %p451 = scmp.lt.s32.totalorder %s22, 1
        %s452 = scalar_select %p451, %s22, 1
        %p453 = scmp.lt.s32.totalorder %s450, 1
        %s454 = scalar_select %p453, %s450, 1
        %s455 = smul.addr %s452, 4
        %s456 = sadd.s32 %s454, %s455
        %s457 = smul.addr %s456, 8
        %s458 = scalar_lea.vmem %s2, %s457
      $region48: #{conv2d_layer_forward.2} parent=43 // pred_fallthru
        _
      // Predicated region
      $region49: #{conv2d_layer_forward.2} parent=43 // pred_check
        %p459 = pneg %p131
      $region50: #{conv2d_layer_forward.2} parent=43 // pred_check_branch
        %461 = sbr.rel (%p459) target = $region52
      $region51: #{conv2d_layer_forward.2} parent=43 // pred_region
        %p462 = scmp.lt.s32.totalorder %s22, 1
        %s463 = scalar_select %p462, %s22, 1
        %p464 = scmp.lt.s32.totalorder %s23, 0
        %s465 = scalar_select %p464, %s23, 0
        %s466 = smul.addr %s465, 2
        %s467 = smul.addr %s463, 2
        %s468 = sadd.s32 %s466, %s467
        %s469 = smul.addr %s468, 8
        %s470 = scalar_lea.vmem %s3, %s469
      $region52: #{conv2d_layer_forward.2} parent=43 // pred_fallthru
        _
      // Predicated region
      $region53: #{conv2d_layer_forward.2} parent=43 // pred_check
        %p471 = pneg %p159
      $region54: #{conv2d_layer_forward.2} parent=43 // pred_check_branch
        %473 = sbr.rel (%p471) target = $region56
      $region55: #{conv2d_layer_forward.2} parent=43 // pred_region
        %p474 = scmp.lt.s32.totalorder %s22, 1
        %s475 = scalar_select %p474, %s22, 1
        %p476 = scmp.lt.s32.totalorder %s23, 0
        %s477 = scalar_select %p476, %s23, 0
        %s478 = smul.addr %s477, 2
        %s479 = smul.addr %s475, 2
        %s480 = sadd.s32 %s478, %s479
        %s481 = smul.addr %s480, 8
        %s482 = scalar_lea.vmem %s4, %s481
      $region56: #{conv2d_layer_forward.2} parent=43 // pred_fallthru
        _
    $region44: #{conv2d_layer_forward.2} parent=5 // pred_fallthru
      _
  $region6: #{conv2d_layer_forward.2} parent=0 // loop_footer
    %s15 = sadd.s32 1, %s11
  $region7: #{conv2d_layer_forward.2} parent=0 // loop_footer_branch
    %10 = sbr.rel target = $region3
  $region8: #{conv2d_layer_forward.2} parent=0 // loop_exit
    _

</llo_original>
